<compile_context>
chip_gen: v6e
topology: v6e:2x2x1
jax: 0.10.0
libtpu: 0.0.40
codegen_flags: <defaults>
</compile_context>

<pallas_src>
import functools

import jax
import jax.numpy as jnp
from jax.experimental import pallas as pl
from jax.experimental.pallas import tpu as pltpu

Z_DIM = 32   # z_dim
W_DIM = 32   # w_dim
N_LAYERS = 8
EPS = 1e-8
NEG_SLOPE = 0.2
SUBLANES = 16  # round batch tiles to 16 rows so bf16 vregs are full


def _round_up(n, m):
    return ((n + m - 1) // m) * m


def mapping_kernel(x_ref, g_ref, w_ref, b_ref, o_ref):
    """Whole 8-layer mapping network on one lane-packed batch tile.

    x_ref: [bt, L] f32          L = pack * Z_DIM lanes (pack samples per row)
    g_ref: [L, L] bf16          block-diag group-averaging matrix (1/Z per ZxZ block)
    w_ref: [N_LAYERS, L, L] bf16  block-diag per-layer weights, WS scale pre-folded
    b_ref: [N_LAYERS, 1, L] f32   per-layer biases tiled across packed groups
    o_ref: [bt, L] f32
    """
    x = x_ref[...]                                    # f32

    # PixelNorm per 32-feature group: group mean of x^2 via one bf16 MXU matmul
    # against the block-diagonal averaging matrix; f32 accumulation.
    x2 = (x * x).astype(jnp.bfloat16)
    ms = jnp.dot(x2, g_ref[...], preferred_element_type=jnp.float32)
    h = x * jax.lax.rsqrt(ms + EPS)                   # f32 on VPU/EUP

    # 8 x (WSLinear -> LeakyReLU), fully unrolled so the scheduler interleaves
    # MXU pushes with the previous layer's VPU work. MXU operands bf16, acc f32.
    for li in range(N_LAYERS):
        h = jnp.dot(h.astype(jnp.bfloat16), w_ref[li],
                    preferred_element_type=jnp.float32) + b_ref[li]
        h = jnp.maximum(h, NEG_SLOPE * h)             # leaky-relu, slope < 1

    o_ref[...] = h.astype(o_ref.dtype)


def pack_params(weights, biases, scales, *, pack=4):
    """One-time packing: fold WS scale into weights, build block-diagonal
    [L, L] bf16 matrices stacked to [N_LAYERS, L, L], tiled biases, and the
    block-diag averaging matrix for PixelNorm. Call once, reuse across calls."""
    Z = weights[0].shape[0]
    L = pack * Z
    eye_p = jnp.eye(pack, dtype=jnp.float32)
    w_stack = jnp.stack(
        [jnp.kron(eye_p, w.astype(jnp.float32) * s) for w, s in zip(weights, scales)]
    ).astype(jnp.bfloat16)                             # [N_LAYERS, L, L] bf16
    b_stack = jnp.stack(
        [jnp.tile(b.astype(jnp.float32), pack).reshape(1, L) for b in biases]
    )                                                  # [N_LAYERS, 1, L] f32
    g_mat = jnp.kron(
        eye_p, jnp.full((Z, Z), 1.0 / Z, dtype=jnp.float32)
    ).astype(jnp.bfloat16)                             # [L, L] bf16
    return w_stack, b_stack, g_mat


@functools.partial(jax.jit, static_argnames=("batch_tile", "pack"))
def mapping_network(x, w_stack, b_stack, g_mat, *, batch_tile=2048, pack=4):
    """x: [B, Z_DIM] f32; packed params from pack_params(). Returns [B, W_DIM] f32."""
    B, Z = x.shape
    L = pack * Z
    assert L % 128 == 0, "pack * feature_dim must be a multiple of 128 lanes"
    n_layers = w_stack.shape[0]
    Wd = b_stack.shape[-1] // pack

    # --- lane-dense packing: `pack` samples per vreg row ----------------------
    rows = pl.cdiv(B, pack)                            # packed rows needed
    bt = min(max(SUBLANES, _round_up(batch_tile, SUBLANES)),
             _round_up(rows, SUBLANES))
    # Guarantee >= 2 grid steps whenever there is enough work so both of v7x's
    # TensorCores get a slice of the "parallel" axis.
    if rows > SUBLANES and _round_up(rows, bt) // bt < 2:
        bt = _round_up(pl.cdiv(rows, 2), SUBLANES)
    rows_pad = _round_up(rows, bt)
    B_pad = rows_pad * pack

    x_pad = jnp.pad(x.astype(jnp.float32), ((0, B_pad - B), (0, 0)))
    x_packed = x_pad.reshape(rows_pad, L)

    grid_spec = pltpu.PrefetchScalarGridSpec(
        num_scalar_prefetch=0,
        grid=(rows_pad // bt,),
        in_specs=[
            pl.BlockSpec((bt, L), lambda i: (i, 0)),               # x tile
            pl.BlockSpec((L, L), lambda i: (0, 0)),                # pixelnorm matrix
            pl.BlockSpec((n_layers, L, L), lambda i: (0, 0, 0)),   # stacked weights
            pl.BlockSpec((n_layers, 1, L), lambda i: (0, 0, 0)),   # stacked biases
        ],
        out_specs=pl.BlockSpec((bt, L), lambda i: (i, 0)),
    )

    out_packed = pl.pallas_call(
        mapping_kernel,
        grid_spec=grid_spec,
        out_shape=jax.ShapeDtypeStruct((rows_pad, L), jnp.float32),
        compiler_params=pltpu.CompilerParams(dimension_semantics=("parallel",)),
    )(x_packed, g_mat, w_stack, b_stack)

    # Unpack lanes back to [B, W_DIM]
    return out_packed.reshape(B_pad, Wd)[:B]


def make_params(key, z_dim, w_dim, n_layers):
    """Deterministic init matching the PyTorch module:
    weight ~ N(0,1) (torch shape [out,in], transposed here to [in,out]),
    bias = 0, scale = sqrt(2 / in_features)."""
    weights, biases, scales = [], [], []
    in_f = z_dim
    for _ in range(n_layers):
        key, sub = jax.random.split(key)
        w_torch = jax.random.normal(sub, (w_dim, in_f), dtype=jnp.float32)  # [out, in]
        weights.append(w_torch.T)                      # [in, out] for h @ W
        biases.append(jnp.zeros((w_dim,), dtype=jnp.float32))
        scales.append((2.0 / in_f) ** 0.5)
        in_f = w_dim
    return weights, biases, scales


def reference(x, weights, biases, scales):
    """Pure-JAX f32 reference (mirrors the PyTorch forward exactly)."""
    ms = jnp.mean(x * x, axis=1, keepdims=True)
    h = x / jnp.sqrt(ms + EPS)
    for w, b, s in zip(weights, biases, scales):
        h = (h * s) @ w + b
        h = jnp.where(h >= 0, h, NEG_SLOPE * h)
    return h


if __name__ == "__main__":
    key = jax.random.PRNGKey(0)
    key, xk = jax.random.split(key)

    B = 256  # small demo batch; wrapper splits it into 2 grid steps (rows=64 -> bt=32)
    x = jax.random.normal(xk, (B, Z_DIM), dtype=jnp.float32)

    weights, biases, scales = make_params(key, Z_DIM, W_DIM, N_LAYERS)
    w_stack, b_stack, g_mat = pack_params(weights, biases, scales, pack=4)  # once

    out = mapping_network(x, w_stack, b_stack, g_mat, pack=4)
    out = jax.block_until_ready(out)

    ref = reference(x, weights, biases, scales)
    assert out.shape == (B, W_DIM)
    # bf16 MXU operands (f32 accumulation) -> looser tolerance vs f32 reference.
    assert jnp.allclose(out, ref, atol=1e-1, rtol=1e-1), float(jnp.max(jnp.abs(out - ref)))

    print("KERNEL_OK")
</pallas_src>

<mosaic_0001>
module attributes {stable_mosaic.version = 11 : i64} {
  func.func @mapping_kernel(%arg0: i32, %arg1: memref<32x128xf32, #tpu.memory_space<vmem>>, %arg2: memref<128x128xbf16, #tpu.memory_space<vmem>>, %arg3: memref<8x128x128xbf16, #tpu.memory_space<vmem>>, %arg4: memref<8x1x128xf32, #tpu.memory_space<vmem>>, %arg5: memref<32x128xf32, #tpu.memory_space<vmem>>) attributes {dimension_semantics = [#tpu.dimension_semantics<parallel>], iteration_bounds = array<i64: 2>, scalar_prefetch = 0 : i64, scratch_operands = 0 : i64, tpu.core_type = #tpu.core_type<tc>, window_params = [{transform_indices = @transform_0, window_bounds = array<i64: 32, 128>}, {pipeline_mode = #tpu.pipeline_mode<synchronous>, transform_indices = @transform_1, window_bounds = array<i64: 128, 128>}, {pipeline_mode = #tpu.pipeline_mode<synchronous>, transform_indices = @transform_2, window_bounds = array<i64: 8, 128, 128>}, {pipeline_mode = #tpu.pipeline_mode<synchronous>, transform_indices = @transform_3, window_bounds = array<i64: 8, 1, 128>}, {transform_indices = @transform_4, window_bounds = array<i64: 32, 128>}]} {
    %c0 = arith.constant 0 : index
    %c0_0 = arith.constant 0 : index
    %0 = vector.load %arg1[%c0, %c0_0] : memref<32x128xf32, #tpu.memory_space<vmem>>, vector<32x128xf32>
    %1 = arith.mulf %0, %0 : vector<32x128xf32>
    %2 = arith.truncf %1 : vector<32x128xf32> to vector<32x128xbf16>
    %c0_1 = arith.constant 0 : index
    %c0_2 = arith.constant 0 : index
    %3 = vector.load %arg2[%c0_1, %c0_2] : memref<128x128xbf16, #tpu.memory_space<vmem>>, vector<128x128xbf16>
    %cst = arith.constant dense<0.000000e+00> : vector<32x128xf32>
    %4 = tpu.matmul %2, %3, %cst {dimension_numbers = #tpu.dot_dimension_numbers<[1], [0], [0], [1], [0, 0, 1, 1], [], []>} : vector<32x128xbf16>, vector<128x128xbf16>, vector<32x128xf32> -> vector<32x128xf32>
    %cst_3 = arith.constant 9.99999993E-9 : f32
    %5 = vector.broadcast %cst_3 : f32 to vector<32x128xf32>
    %6 = arith.addf %4, %5 : vector<32x128xf32>
    %7 = math.rsqrt %6 : vector<32x128xf32>
    %8 = arith.mulf %0, %7 : vector<32x128xf32>
    %9 = arith.truncf %8 : vector<32x128xf32> to vector<32x128xbf16>
    %c0_4 = arith.constant 0 : index
    %c0_5 = arith.constant 0 : index
    %c0_6 = arith.constant 0 : index
    %10 = vector.load %arg3[%c0_4, %c0_5, %c0_6] : memref<8x128x128xbf16, #tpu.memory_space<vmem>>, vector<1x128x128xbf16>
    %11 = vector.shape_cast %10 : vector<1x128x128xbf16> to vector<128x128xbf16>
    %cst_7 = arith.constant dense<0.000000e+00> : vector<32x128xf32>
    %12 = tpu.matmul %9, %11, %cst_7 {dimension_numbers = #tpu.dot_dimension_numbers<[1], [0], [0], [1], [0, 0, 1, 1], [], []>} : vector<32x128xbf16>, vector<128x128xbf16>, vector<32x128xf32> -> vector<32x128xf32>
    %c0_8 = arith.constant 0 : index
    %c0_9 = arith.constant 0 : index
    %c0_10 = arith.constant 0 : index
    %13 = vector.load %arg4[%c0_8, %c0_9, %c0_10] : memref<8x1x128xf32, #tpu.memory_space<vmem>>, vector<1x1x128xf32>
    %14 = vector.shape_cast %13 : vector<1x1x128xf32> to vector<1x128xf32>
    %15 = vector.broadcast %14 : vector<1x128xf32> to vector<32x128xf32>
    %16 = arith.addf %12, %15 : vector<32x128xf32>
    %cst_11 = arith.constant 2.000000e-01 : f32
    %17 = vector.broadcast %cst_11 : f32 to vector<32x128xf32>
    %18 = arith.mulf %17, %16 : vector<32x128xf32>
    %19 = arith.maximumf %16, %18 : vector<32x128xf32>
    %20 = arith.truncf %19 : vector<32x128xf32> to vector<32x128xbf16>
    %c1 = arith.constant 1 : index
    %c0_12 = arith.constant 0 : index
    %c0_13 = arith.constant 0 : index
    %21 = vector.load %arg3[%c1, %c0_12, %c0_13] : memref<8x128x128xbf16, #tpu.memory_space<vmem>>, vector<1x128x128xbf16>
    %22 = vector.shape_cast %21 : vector<1x128x128xbf16> to vector<128x128xbf16>
    %cst_14 = arith.constant dense<0.000000e+00> : vector<32x128xf32>
    %23 = tpu.matmul %20, %22, %cst_14 {dimension_numbers = #tpu.dot_dimension_numbers<[1], [0], [0], [1], [0, 0, 1, 1], [], []>} : vector<32x128xbf16>, vector<128x128xbf16>, vector<32x128xf32> -> vector<32x128xf32>
    %c1_15 = arith.constant 1 : index
    %c0_16 = arith.constant 0 : index
    %c0_17 = arith.constant 0 : index
    %24 = vector.load %arg4[%c1_15, %c0_16, %c0_17] : memref<8x1x128xf32, #tpu.memory_space<vmem>>, vector<1x1x128xf32>
    %25 = vector.shape_cast %24 : vector<1x1x128xf32> to vector<1x128xf32>
    %26 = vector.broadcast %25 : vector<1x128xf32> to vector<32x128xf32>
    %27 = arith.addf %23, %26 : vector<32x128xf32>
    %cst_18 = arith.constant 2.000000e-01 : f32
    %28 = vector.broadcast %cst_18 : f32 to vector<32x128xf32>
    %29 = arith.mulf %28, %27 : vector<32x128xf32>
    %30 = arith.maximumf %27, %29 : vector<32x128xf32>
    %31 = arith.truncf %30 : vector<32x128xf32> to vector<32x128xbf16>
    %c2 = arith.constant 2 : index
    %c0_19 = arith.constant 0 : index
    %c0_20 = arith.constant 0 : index
    %32 = vector.load %arg3[%c2, %c0_19, %c0_20] : memref<8x128x128xbf16, #tpu.memory_space<vmem>>, vector<1x128x128xbf16>
    %33 = vector.shape_cast %32 : vector<1x128x128xbf16> to vector<128x128xbf16>
    %cst_21 = arith.constant dense<0.000000e+00> : vector<32x128xf32>
    %34 = tpu.matmul %31, %33, %cst_21 {dimension_numbers = #tpu.dot_dimension_numbers<[1], [0], [0], [1], [0, 0, 1, 1], [], []>} : vector<32x128xbf16>, vector<128x128xbf16>, vector<32x128xf32> -> vector<32x128xf32>
    %c2_22 = arith.constant 2 : index
    %c0_23 = arith.constant 0 : index
    %c0_24 = arith.constant 0 : index
    %35 = vector.load %arg4[%c2_22, %c0_23, %c0_24] : memref<8x1x128xf32, #tpu.memory_space<vmem>>, vector<1x1x128xf32>
    %36 = vector.shape_cast %35 : vector<1x1x128xf32> to vector<1x128xf32>
    %37 = vector.broadcast %36 : vector<1x128xf32> to vector<32x128xf32>
    %38 = arith.addf %34, %37 : vector<32x128xf32>
    %cst_25 = arith.constant 2.000000e-01 : f32
    %39 = vector.broadcast %cst_25 : f32 to vector<32x128xf32>
    %40 = arith.mulf %39, %38 : vector<32x128xf32>
    %41 = arith.maximumf %38, %40 : vector<32x128xf32>
    %42 = arith.truncf %41 : vector<32x128xf32> to vector<32x128xbf16>
    %c3 = arith.constant 3 : index
    %c0_26 = arith.constant 0 : index
    %c0_27 = arith.constant 0 : index
    %43 = vector.load %arg3[%c3, %c0_26, %c0_27] : memref<8x128x128xbf16, #tpu.memory_space<vmem>>, vector<1x128x128xbf16>
    %44 = vector.shape_cast %43 : vector<1x128x128xbf16> to vector<128x128xbf16>
    %cst_28 = arith.constant dense<0.000000e+00> : vector<32x128xf32>
    %45 = tpu.matmul %42, %44, %cst_28 {dimension_numbers = #tpu.dot_dimension_numbers<[1], [0], [0], [1], [0, 0, 1, 1], [], []>} : vector<32x128xbf16>, vector<128x128xbf16>, vector<32x128xf32> -> vector<32x128xf32>
    %c3_29 = arith.constant 3 : index
    %c0_30 = arith.constant 0 : index
    %c0_31 = arith.constant 0 : index
    %46 = vector.load %arg4[%c3_29, %c0_30, %c0_31] : memref<8x1x128xf32, #tpu.memory_space<vmem>>, vector<1x1x128xf32>
    %47 = vector.shape_cast %46 : vector<1x1x128xf32> to vector<1x128xf32>
    %48 = vector.broadcast %47 : vector<1x128xf32> to vector<32x128xf32>
    %49 = arith.addf %45, %48 : vector<32x128xf32>
    %cst_32 = arith.constant 2.000000e-01 : f32
    %50 = vector.broadcast %cst_32 : f32 to vector<32x128xf32>
    %51 = arith.mulf %50, %49 : vector<32x128xf32>
    %52 = arith.maximumf %49, %51 : vector<32x128xf32>
    %53 = arith.truncf %52 : vector<32x128xf32> to vector<32x128xbf16>
    %c4 = arith.constant 4 : index
    %c0_33 = arith.constant 0 : index
    %c0_34 = arith.constant 0 : index
    %54 = vector.load %arg3[%c4, %c0_33, %c0_34] : memref<8x128x128xbf16, #tpu.memory_space<vmem>>, vector<1x128x128xbf16>
    %55 = vector.shape_cast %54 : vector<1x128x128xbf16> to vector<128x128xbf16>
    %cst_35 = arith.constant dense<0.000000e+00> : vector<32x128xf32>
    %56 = tpu.matmul %53, %55, %cst_35 {dimension_numbers = #tpu.dot_dimension_numbers<[1], [0], [0], [1], [0, 0, 1, 1], [], []>} : vector<32x128xbf16>, vector<128x128xbf16>, vector<32x128xf32> -> vector<32x128xf32>
    %c4_36 = arith.constant 4 : index
    %c0_37 = arith.constant 0 : index
    %c0_38 = arith.constant 0 : index
    %57 = vector.load %arg4[%c4_36, %c0_37, %c0_38] : memref<8x1x128xf32, #tpu.memory_space<vmem>>, vector<1x1x128xf32>
    %58 = vector.shape_cast %57 : vector<1x1x128xf32> to vector<1x128xf32>
    %59 = vector.broadcast %58 : vector<1x128xf32> to vector<32x128xf32>
    %60 = arith.addf %56, %59 : vector<32x128xf32>
    %cst_39 = arith.constant 2.000000e-01 : f32
    %61 = vector.broadcast %cst_39 : f32 to vector<32x128xf32>
    %62 = arith.mulf %61, %60 : vector<32x128xf32>
    %63 = arith.maximumf %60, %62 : vector<32x128xf32>
    %64 = arith.truncf %63 : vector<32x128xf32> to vector<32x128xbf16>
    %c5 = arith.constant 5 : index
    %c0_40 = arith.constant 0 : index
    %c0_41 = arith.constant 0 : index
    %65 = vector.load %arg3[%c5, %c0_40, %c0_41] : memref<8x128x128xbf16, #tpu.memory_space<vmem>>, vector<1x128x128xbf16>
    %66 = vector.shape_cast %65 : vector<1x128x128xbf16> to vector<128x128xbf16>
    %cst_42 = arith.constant dense<0.000000e+00> : vector<32x128xf32>
    %67 = tpu.matmul %64, %66, %cst_42 {dimension_numbers = #tpu.dot_dimension_numbers<[1], [0], [0], [1], [0, 0, 1, 1], [], []>} : vector<32x128xbf16>, vector<128x128xbf16>, vector<32x128xf32> -> vector<32x128xf32>
    %c5_43 = arith.constant 5 : index
    %c0_44 = arith.constant 0 : index
    %c0_45 = arith.constant 0 : index
    %68 = vector.load %arg4[%c5_43, %c0_44, %c0_45] : memref<8x1x128xf32, #tpu.memory_space<vmem>>, vector<1x1x128xf32>
    %69 = vector.shape_cast %68 : vector<1x1x128xf32> to vector<1x128xf32>
    %70 = vector.broadcast %69 : vector<1x128xf32> to vector<32x128xf32>
    %71 = arith.addf %67, %70 : vector<32x128xf32>
    %cst_46 = arith.constant 2.000000e-01 : f32
    %72 = vector.broadcast %cst_46 : f32 to vector<32x128xf32>
    %73 = arith.mulf %72, %71 : vector<32x128xf32>
    %74 = arith.maximumf %71, %73 : vector<32x128xf32>
    %75 = arith.truncf %74 : vector<32x128xf32> to vector<32x128xbf16>
    %c6 = arith.constant 6 : index
    %c0_47 = arith.constant 0 : index
    %c0_48 = arith.constant 0 : index
    %76 = vector.load %arg3[%c6, %c0_47, %c0_48] : memref<8x128x128xbf16, #tpu.memory_space<vmem>>, vector<1x128x128xbf16>
    %77 = vector.shape_cast %76 : vector<1x128x128xbf16> to vector<128x128xbf16>
    %cst_49 = arith.constant dense<0.000000e+00> : vector<32x128xf32>
    %78 = tpu.matmul %75, %77, %cst_49 {dimension_numbers = #tpu.dot_dimension_numbers<[1], [0], [0], [1], [0, 0, 1, 1], [], []>} : vector<32x128xbf16>, vector<128x128xbf16>, vector<32x128xf32> -> vector<32x128xf32>
    %c6_50 = arith.constant 6 : index
    %c0_51 = arith.constant 0 : index
    %c0_52 = arith.constant 0 : index
    %79 = vector.load %arg4[%c6_50, %c0_51, %c0_52] : memref<8x1x128xf32, #tpu.memory_space<vmem>>, vector<1x1x128xf32>
    %80 = vector.shape_cast %79 : vector<1x1x128xf32> to vector<1x128xf32>
    %81 = vector.broadcast %80 : vector<1x128xf32> to vector<32x128xf32>
    %82 = arith.addf %78, %81 : vector<32x128xf32>
    %cst_53 = arith.constant 2.000000e-01 : f32
    %83 = vector.broadcast %cst_53 : f32 to vector<32x128xf32>
    %84 = arith.mulf %83, %82 : vector<32x128xf32>
    %85 = arith.maximumf %82, %84 : vector<32x128xf32>
    %86 = arith.truncf %85 : vector<32x128xf32> to vector<32x128xbf16>
    %c7 = arith.constant 7 : index
    %c0_54 = arith.constant 0 : index
    %c0_55 = arith.constant 0 : index
    %87 = vector.load %arg3[%c7, %c0_54, %c0_55] : memref<8x128x128xbf16, #tpu.memory_space<vmem>>, vector<1x128x128xbf16>
    %88 = vector.shape_cast %87 : vector<1x128x128xbf16> to vector<128x128xbf16>
    %cst_56 = arith.constant dense<0.000000e+00> : vector<32x128xf32>
    %89 = tpu.matmul %86, %88, %cst_56 {dimension_numbers = #tpu.dot_dimension_numbers<[1], [0], [0], [1], [0, 0, 1, 1], [], []>} : vector<32x128xbf16>, vector<128x128xbf16>, vector<32x128xf32> -> vector<32x128xf32>
    %c7_57 = arith.constant 7 : index
    %c0_58 = arith.constant 0 : index
    %c0_59 = arith.constant 0 : index
    %90 = vector.load %arg4[%c7_57, %c0_58, %c0_59] : memref<8x1x128xf32, #tpu.memory_space<vmem>>, vector<1x1x128xf32>
    %91 = vector.shape_cast %90 : vector<1x1x128xf32> to vector<1x128xf32>
    %92 = vector.broadcast %91 : vector<1x128xf32> to vector<32x128xf32>
    %93 = arith.addf %89, %92 : vector<32x128xf32>
    %cst_60 = arith.constant 2.000000e-01 : f32
    %94 = vector.broadcast %cst_60 : f32 to vector<32x128xf32>
    %95 = arith.mulf %94, %93 : vector<32x128xf32>
    %96 = arith.maximumf %93, %95 : vector<32x128xf32>
    %c0_61 = arith.constant 0 : index
    %c0_62 = arith.constant 0 : index
    %97 = vector.load %arg5[%c0_61, %c0_62] : memref<32x128xf32, #tpu.memory_space<vmem>>, vector<32x128xf32>
    tpu.vector_store %arg5[%c0_61, %c0_62], %96 {strides = array<i32>} : memref<32x128xf32, #tpu.memory_space<vmem>>, vector<32x128xf32>,
    return
  }
  func.func @transform_0(%arg0: i32) -> (i32, i32) {
    %c0_i32 = arith.constant 0 : i32
    %c0_i32_0 = arith.constant 0 : i32
    return %arg0, %c0_i32 : i32, i32
  }
  func.func @transform_1(%arg0: i32) -> (i32, i32) {
    %c0_i32 = arith.constant 0 : i32
    %c0_i32_0 = arith.constant 0 : i32
    %c0_i32_1 = arith.constant 0 : i32
    return %c0_i32, %c0_i32_0 : i32, i32
  }
  func.func @transform_2(%arg0: i32) -> (i32, i32, i32) {
    %c0_i32 = arith.constant 0 : i32
    %c0_i32_0 = arith.constant 0 : i32
    %c0_i32_1 = arith.constant 0 : i32
    %c0_i32_2 = arith.constant 0 : i32
    return %c0_i32, %c0_i32_0, %c0_i32_1 : i32, i32, i32
  }
  func.func @transform_3(%arg0: i32) -> (i32, i32, i32) {
    %c0_i32 = arith.constant 0 : i32
    %c0_i32_0 = arith.constant 0 : i32
    %c0_i32_1 = arith.constant 0 : i32
    %c0_i32_2 = arith.constant 0 : i32
    return %c0_i32, %c0_i32_0, %c0_i32_1 : i32, i32, i32
  }
  func.func @transform_4(%arg0: i32) -> (i32, i32) {
    %c0_i32 = arith.constant 0 : i32
    %c0_i32_0 = arith.constant 0 : i32
    return %arg0, %c0_i32 : i32, i32
  }
}

</mosaic_0001>

<llo_original>
// kernel: mapping_network.1
$region0: #{mapping_network.1}
  #allocation0 [shape = 'u32[]', space=smem, size = 0x4, offset = 0x4, fixed_abs, tag = 'smem constant byte address 0x4 - core index']
  #allocation1 [shape = 'u32[144,128]{1,0:T(1,128)}', space=vmem, size = 0x12000, scoped, tag = 'internal scratch']
  %s0 = inlined_call_operand.vmem [shape: f32[64,128], index: 0, kind: input, shape index: {}]
  %s1 = inlined_call_operand.vmem [shape: bf16[128,128], index: 1, kind: input, shape index: {}]
  %s2 = inlined_call_operand.vmem [shape: bf16[8,128,128], index: 2, kind: input, shape index: {}]
  %s3 = inlined_call_operand.vmem [shape: f32[8,1,128], index: 3, kind: input, shape index: {}]
  %s4 = inlined_call_operand.vmem [shape: f32[64,128], index: 4, kind: output, shape index: {}]
  %s5 = sld [smem:[#allocation0]]
  $region49: #{mapping_network.1} parent=0
    _
  %s7 = ssub.s32 1, %s5
  %s8 = scalar_select 0, %s7, %s5
  loop: start=0, step=1, limit=4
  $region2: #{mapping_network.1} parent=0 // loop_pre_header
    _
  $region3: #{mapping_network.1} parent=0 // loop_header
    %s10 = sphi 0, %s14
    %p11 = scmp.ge.s32.totalorder %s10, 4
    %s20 = sphi 0, %s22
    %s23 = sphi 0, %s20
    %s24 = sphi 0, %s23
    %s40 = sphi 0, %s24
    %s44 = sphi 0, %s44
    %s46 = sphi 0, %s44
    %s47 = sphi 0, %s46
    %s61 = sphi 0, %s47
    %s65 = sphi 0, %s65
    %s67 = sphi 0, %s65
    %s68 = sphi 0, %s67
    %s82 = sphi 0, %s68
    %s86 = sphi 0, %s86
    %s88 = sphi 0, %s86
    %s89 = sphi 0, %s88
    %s103 = sphi 0, %s89
    %s109 = sphi 0, %s111
    %s112 = sphi 0, %s109
    %s113 = sphi 0, %s112
    %s129 = sphi 0, %s113
  $region4: #{mapping_network.1} parent=0 // loop_header_branch
    %13 = sbr.rel (%p11) target = $region8
  $region5: #{mapping_network.1} parent=0 // loop_body
    %s15 = ssub.s32 %s10, 1
    %s16 = ssub.s32 %s10, 2
    %s17 = sadd.s32 %s10, 1
    %s18 = ssub.s32 %s10, %s17
    %p19 = scmp.eq.s32.totalorder %s18, 0
    %s21 = sadd.s32 %s20, 1
    %s22 = scalar_select %p19, %s20, %s21
    %p25 = pneg %p19
    %p26 = scmp.eq.s32.totalorder %s10, 1
    %p27 = por %p25, %p26
    %p28 = scmp.ne.s32.totalorder %s20, %s23
    %p29 = scmp.eq.s32.totalorder %s10, 0
    %p30 = por %p28, %p29
    %p31 = scmp.ne.s32.totalorder %s20, %s23
    %p32 = scmp.eq.s32.totalorder %s15, 1
    %p33 = por %p31, %p32
    %p34 = scmp.ne.s32.totalorder %s23, %s24
    %p35 = scmp.eq.s32.totalorder %s15, 0
    %p36 = por %p34, %p35
    %p37 = scmp.ne.s32.totalorder %s23, %s24
    %p38 = scmp.eq.s32.totalorder %s16, 1
    %p39 = por %p37, %p38
    %p41 = scmp.ne.s32.totalorder %s24, %s40
    %p42 = scmp.eq.s32.totalorder %s16, 0
    %p43 = por %p41, %p42
    %s45 = sadd.s32 %s44, 1
    %p48 = scmp.eq.s32.totalorder %s10, 1
    %p49 = scmp.ne.s32.totalorder %s44, %s46
    %p50 = scmp.eq.s32.totalorder %s10, 0
    %p51 = por %p49, %p50
    %p52 = scmp.ne.s32.totalorder %s44, %s46
    %p53 = scmp.eq.s32.totalorder %s15, 1
    %p54 = por %p52, %p53
    %p55 = scmp.ne.s32.totalorder %s46, %s47
    %p56 = scmp.eq.s32.totalorder %s15, 0
    %p57 = por %p55, %p56
    %p58 = scmp.ne.s32.totalorder %s46, %s47
    %p59 = scmp.eq.s32.totalorder %s16, 1
    %p60 = por %p58, %p59
    %p62 = scmp.ne.s32.totalorder %s47, %s61
    %p63 = scmp.eq.s32.totalorder %s16, 0
    %p64 = por %p62, %p63
    %s66 = sadd.s32 %s65, 1
    %p69 = scmp.eq.s32.totalorder %s10, 1
    %p70 = scmp.ne.s32.totalorder %s65, %s67
    %p71 = scmp.eq.s32.totalorder %s10, 0
    %p72 = por %p70, %p71
    %p73 = scmp.ne.s32.totalorder %s65, %s67
    %p74 = scmp.eq.s32.totalorder %s15, 1
    %p75 = por %p73, %p74
    %p76 = scmp.ne.s32.totalorder %s67, %s68
    %p77 = scmp.eq.s32.totalorder %s15, 0
    %p78 = por %p76, %p77
    %p79 = scmp.ne.s32.totalorder %s67, %s68
    %p80 = scmp.eq.s32.totalorder %s16, 1
    %p81 = por %p79, %p80
    %p83 = scmp.ne.s32.totalorder %s68, %s82
    %p84 = scmp.eq.s32.totalorder %s16, 0
    %p85 = por %p83, %p84
    %s87 = sadd.s32 %s86, 1
    %p90 = scmp.eq.s32.totalorder %s10, 1
    %p91 = scmp.ne.s32.totalorder %s86, %s88
    %p92 = scmp.eq.s32.totalorder %s10, 0
    %p93 = por %p91, %p92
    %p94 = scmp.ne.s32.totalorder %s86, %s88
    %p95 = scmp.eq.s32.totalorder %s15, 1
    %p96 = por %p94, %p95
    %p97 = scmp.ne.s32.totalorder %s88, %s89
    %p98 = scmp.eq.s32.totalorder %s15, 0
    %p99 = por %p97, %p98
    %p100 = scmp.ne.s32.totalorder %s88, %s89
    %p101 = scmp.eq.s32.totalorder %s16, 1
    %p102 = por %p100, %p101
    %p104 = scmp.ne.s32.totalorder %s89, %s103
    %p105 = scmp.eq.s32.totalorder %s16, 0
    %p106 = por %p104, %p105
    %s107 = ssub.s32 %s10, %s17
    %p108 = scmp.eq.s32.totalorder %s107, 0
    %s110 = sadd.s32 %s109, 1
    %s111 = scalar_select %p108, %s109, %s110
    %p114 = pneg %p108
    %p115 = scmp.eq.s32.totalorder %s10, 1
    %p116 = por %p114, %p115
    %p117 = scmp.ne.s32.totalorder %s109, %s112
    %p118 = scmp.eq.s32.totalorder %s10, 0
    %p119 = por %p117, %p118
    %p120 = scmp.ne.s32.totalorder %s109, %s112
    %p121 = scmp.eq.s32.totalorder %s15, 1
    %p122 = por %p120, %p121
    %p123 = scmp.ne.s32.totalorder %s112, %s113
    %p124 = scmp.eq.s32.totalorder %s15, 0
    %p125 = por %p123, %p124
    %p126 = scmp.ne.s32.totalorder %s112, %s113
    %p127 = scmp.eq.s32.totalorder %s16, 1
    %p128 = por %p126, %p127
    %p130 = scmp.ne.s32.totalorder %s113, %s129
    %p131 = scmp.eq.s32.totalorder %s16, 0
    %p132 = por %p130, %p131
    %p133 = scmp.le.s32.totalorder 1, %s10
    %p134 = scmp.lt.s32.totalorder %s10, 3
    %p135 = pnand %p133, %p134
    %p136 = pneg %p135
    // Predicated region
    $region9: #{mapping_network.1} parent=5 // pred_check
      _
    $region10: #{mapping_network.1} parent=5 // pred_check_branch
      %138 = sbr.rel (%p135) target = $region12
    $region11: #{mapping_network.1} parent=5 // pred_region
      %s139 = ssub.s32 %s10, 1
      // Predicated region
      $region13: #{mapping_network.1} parent=11 // pred_check
        %p140 = pneg %p57
      $region14: #{mapping_network.1} parent=11 // pred_check_branch
        %142 = sbr.rel (%p140) target = $region16
      $region15: #{mapping_network.1} parent=11 // pred_region
        _
      $region16: #{mapping_network.1} parent=11 // pred_fallthru
        _
      // Predicated region
      $region17: #{mapping_network.1} parent=11 // pred_check
        %p143 = pneg %p78
      $region18: #{mapping_network.1} parent=11 // pred_check_branch
        %145 = sbr.rel (%p143) target = $region20
      $region19: #{mapping_network.1} parent=11 // pred_region
        _
      $region20: #{mapping_network.1} parent=11 // pred_fallthru
        _
      // Predicated region
      $region21: #{mapping_network.1} parent=11 // pred_check
        %p146 = pneg %p99
      $region22: #{mapping_network.1} parent=11 // pred_check_branch
        %148 = sbr.rel (%p146) target = $region24
      $region23: #{mapping_network.1} parent=11 // pred_region
        _
      $region24: #{mapping_network.1} parent=11 // pred_fallthru
        _
    $region12: #{mapping_network.1} parent=5 // pred_fallthru
      _
    %p149 = scmp.lt.s32.totalorder %s10, 2
    // Predicated region
    $region25: #{mapping_network.1} parent=5 // pred_check
      %p150 = pneg %p149
    $region26: #{mapping_network.1} parent=5 // pred_check_branch
      %152 = sbr.rel (%p150) target = $region28
    $region27: #{mapping_network.1} parent=5 // pred_region
      // Predicated region
      $region29: #{mapping_network.1} parent=27 // pred_check
        %p153 = pneg %p30
      $region30: #{mapping_network.1} parent=27 // pred_check_branch
        %155 = sbr.rel (%p153) target = $region32
      $region31: #{mapping_network.1} parent=27 // pred_region
        %s156 = smul.u32 4, %s10
        %p157 = scmp.lt.s32.totalorder %s156, 7
        %s158 = scalar_select %p157, %s156, 7
        %s159 = smul.addr %s158, 8
        %s160 = scalar_lea.vmem %s0, %s159
        %s161 = smul.u32 4, %s10
      $region32: #{mapping_network.1} parent=27 // pred_fallthru
        _
    $region28: #{mapping_network.1} parent=5 // pred_fallthru
      _
    %p162 = scmp.le.s32.totalorder 1, %s10
    %p163 = scmp.lt.s32.totalorder %s10, 3
    %p164 = pnand %p162, %p163
    %p165 = pneg %p164
    // Predicated region
    $region33: #{mapping_network.1} parent=5 // pred_check
      _
    $region34: #{mapping_network.1} parent=5 // pred_check_branch
      %167 = sbr.rel (%p164) target = $region36
    $region35: #{mapping_network.1} parent=5 // pred_region
      %s168 = ssub.s32 %s10, 1
      %s169 = smul.u32 4, %s15
      %p170 = scmp.lt.s32.totalorder %s169, 7
      %s171 = scalar_select %p170, %s169, 7
      %s172 = smul.addr %s171, 8
      %s173 = scalar_lea.vmem %s0, %s172
      %p174 = pneg %p36
      %p175 = pneg %p33
      %p176 = pneg %p57
      %p177 = pneg %p54
      %p178 = pneg %p78
      %p179 = pneg %p75
      %p180 = pneg %p99
      %p181 = pneg %p96
      %p182 = pneg %p125
      %p183 = pneg %p122
      %s184 = smul.u32 4, %s15
      %p185 = scmp.lt.s32.totalorder %s184, 7
      %s186 = scalar_select %p185, %s184, 7
      %s187 = smul.addr %s186, 8
      %s188 = scalar_lea.vmem %s4, %s187
      %s189 = smul.u32 4, %s15
      %p190 = scmp.lt.s32.totalorder %s189, 7
      %s191 = scalar_select %p190, %s189, 7
      %s192 = smul.addr %s191, 8
      %s193 = scalar_lea.vmem %s0, %s192
      %s194 = smul.u32 4, %s15
      %s195 = smul.u32 4, %s15
      %p196 = scmp.lt.s32.totalorder %s195, 7
      %s197 = scalar_select %p196, %s195, 7
      %s198 = smul.addr %s197, 8
      %s199 = scalar_lea.vmem %s4, %s198
      %s200 = smul.u32 4, %s15
      %v202 = vld [vmem:[%s193] sm:$0xff]
      %v203 = vld [vmem:[%s193 + $0x8] sm:$0xff]
      %v204 = vld [vmem:[%s193 + $0x10] sm:$0xff]
      %v205 = vld [vmem:[%s193 + $0x18] sm:$0xff]
      %v206 = vmul.f32 %v202, %v202
      %v207 = vmul.f32 %v203, %v203
      %v208 = vmul.f32 %v204, %v204
      %v209 = vmul.f32 %v205, %v205
      %v210 = vpack.c.bf16 %v207, %v206
      %v211 = vpack.c.bf16 %v209, %v208
      %v212 = vld [vmem:[%s1] sm:$0xf]
      %v213 = vld [vmem:[%s1 + $0x4] sm:$0xf]
      %v214 = vld [vmem:[%s1 + $0x8] sm:$0xf]
      %v215 = vld [vmem:[%s1 + $0xc] sm:$0xf]
      %v216 = vld [vmem:[%s1 + $0x10] sm:$0xf]
      %v217 = vld [vmem:[%s1 + $0x14] sm:$0xf]
      %v218 = vld [vmem:[%s1 + $0x18] sm:$0xf]
      %v219 = vld [vmem:[%s1 + $0x1c] sm:$0xf]
      %v220 = vld [vmem:[%s1 + $0x20] sm:$0xf]
      %v221 = vld [vmem:[%s1 + $0x24] sm:$0xf]
      %v222 = vld [vmem:[%s1 + $0x28] sm:$0xf]
      %v223 = vld [vmem:[%s1 + $0x2c] sm:$0xf]
      %v224 = vld [vmem:[%s1 + $0x30] sm:$0xf]
      %v225 = vld [vmem:[%s1 + $0x34] sm:$0xf]
      %v226 = vld [vmem:[%s1 + $0x38] sm:$0xf]
      %v227 = vld [vmem:[%s1 + $0x3c] sm:$0xf]
      %v244 = vunpack.c.l.b16 %v212
      %v245 = vunpack.c.l.b16 %v213
      %v246 = vunpack.c.l.b16 %v214
      %v247 = vunpack.c.l.b16 %v215
      %v248 = vunpack.c.l.b16 %v216
      %v249 = vunpack.c.l.b16 %v217
      %v250 = vunpack.c.l.b16 %v218
      %v251 = vunpack.c.l.b16 %v219
      %v252 = vunpack.c.l.b16 %v220
      %v253 = vunpack.c.l.b16 %v221
      %v254 = vunpack.c.l.b16 %v222
      %v255 = vunpack.c.l.b16 %v223
      %v256 = vunpack.c.l.b16 %v224
      %v257 = vunpack.c.l.b16 %v225
      %v258 = vunpack.c.l.b16 %v226
      %v259 = vunpack.c.l.b16 %v227
      %v260 = vpack.c.b16 %v245, %v244
      %v261 = vpack.c.b16 %v247, %v246
      %v262 = vpack.c.b16 %v249, %v248
      %v263 = vpack.c.b16 %v251, %v250
      %v264 = vpack.c.b16 %v253, %v252
      %v265 = vpack.c.b16 %v255, %v254
      %v266 = vpack.c.b16 %v257, %v256
      %v267 = vpack.c.b16 %v259, %v258
      %276 = vmatprep.subr.bf16.mxu0 0
      %277 = vmatpush1.bf16.msra.mxu0 %v267
      %278 = vmatprep.subr.bf16.mxu0 0
      %279 = vmatpush1.bf16.msra.mxu0 %v266
      %280 = vmatprep.subr.bf16.mxu0 0
      %281 = vmatpush1.bf16.msra.mxu0 %v265
      %282 = vmatprep.subr.bf16.mxu0 0
      %283 = vmatpush1.bf16.msra.mxu0 %v264
      %284 = vmatprep.subr.bf16.mxu0 0
      %285 = vmatpush1.bf16.msra.mxu0 %v263
      %286 = vmatprep.subr.bf16.mxu0 0
      %287 = vmatpush1.bf16.msra.mxu0 %v262
      %288 = vmatprep.subr.bf16.mxu0 0
      %289 = vmatpush1.bf16.msra.mxu0 %v261
      %290 = vmatprep.subr.bf16.mxu0 0
      %291 = vmatpush1.bf16.msra.mxu0 %v260
      %292 = vmatprep.subr.bf16.mxu0 0
      %293 = vmatpush2.bf16.msra.mxu0 0
      %294 = vmatprep.subr.bf16.mxu0 0
      %295 = vmatpush2.bf16.msra.mxu0 0
      %296 = vmatprep.subr.bf16.mxu0 0
      %297 = vmatpush2.bf16.msra.mxu0 0
      %298 = vmatprep.subr.bf16.mxu0 0
      %299 = vmatpush2.bf16.msra.mxu0 0
      %300 = vmatprep.subr.bf16.mxu0 0
      %301 = vmatpush2.bf16.msra.mxu0 0
      %302 = vmatprep.subr.bf16.mxu0 0
      %303 = vmatpush2.bf16.msra.mxu0 0
      %304 = vmatprep.subr.bf16.mxu0 0
      %305 = vmatpush2.bf16.msra.mxu0 0
      %306 = vmatprep.subr.bf16.mxu0 0
      %307 = vmatpush2.bf16.msra.mxu0 0
      %308 = vmatprep.mubr.bf16.mxu0 0
      %309 = vmatmul.mubr.bf16.gmra.mxu0 %v210
      %v310 = vpop.f32.mrf.mxu0
      %v311 = vadd.f32 1e-08, %v310
      %v312 = vpop.f32.mrf.mxu0
      %v313 = vpop.f32.mrf.mxu0
      %v314 = vadd.f32 1e-08, %v313
      %v315 = vpop.f32.mrf.mxu0
      %316 = vmatprep.mubr.bf16.mxu0 0
      %317 = vmatmul.mubr.bf16.gmra.mxu0 %v211
      %v318 = vpop.f32.mrf.mxu0
      %v319 = vadd.f32 1e-08, %v318
      %v320 = vpop.f32.mrf.mxu0
      %v321 = vpop.f32.mrf.mxu0
      %v322 = vadd.f32 1e-08, %v321
      %v323 = vpop.f32.mrf.mxu0
      %324 = vdwg.mxu0
      %v325 = vrsqrt.pop %v311
      %v326 = vrsqrt.pop %v314
      %v327 = vrsqrt.pop %v319
      %v328 = vrsqrt.pop %v322
      %v329 = vmul.f32 %v202, %v325
      %v330 = vmul.f32 %v203, %v326
      %v331 = vmul.f32 %v204, %v327
      %v332 = vmul.f32 %v205, %v328
      %v333 = vpack.c.bf16 %v330, %v329
      %v334 = vpack.c.bf16 %v332, %v331
      %v335 = vld [vmem:[%s2] sm:$0xf]
      %v336 = vld [vmem:[%s2 + $0x4] sm:$0xf]
      %v337 = vld [vmem:[%s2 + $0x8] sm:$0xf]
      %v338 = vld [vmem:[%s2 + $0xc] sm:$0xf]
      %v339 = vld [vmem:[%s2 + $0x10] sm:$0xf]
      %v340 = vld [vmem:[%s2 + $0x14] sm:$0xf]
      %v341 = vld [vmem:[%s2 + $0x18] sm:$0xf]
      %v342 = vld [vmem:[%s2 + $0x1c] sm:$0xf]
      %v343 = vld [vmem:[%s2 + $0x20] sm:$0xf]
      %v344 = vld [vmem:[%s2 + $0x24] sm:$0xf]
      %v345 = vld [vmem:[%s2 + $0x28] sm:$0xf]
      %v346 = vld [vmem:[%s2 + $0x2c] sm:$0xf]
      %v347 = vld [vmem:[%s2 + $0x30] sm:$0xf]
      %v348 = vld [vmem:[%s2 + $0x34] sm:$0xf]
      %v349 = vld [vmem:[%s2 + $0x38] sm:$0xf]
      %v350 = vld [vmem:[%s2 + $0x3c] sm:$0xf]
      %v351 = vld [vmem:[%s3] sm:$0x1]
      %v353 = vlaneseq
      %v354 = vshrl.u32 %v353, 7
      %v355 = vsub.s32 0, %v354
      %v356 = vrot.slane %v351, %v355
      %v374 = vunpack.c.l.b16 %v335
      %v375 = vunpack.c.l.b16 %v336
      %v376 = vunpack.c.l.b16 %v337
      %v377 = vunpack.c.l.b16 %v338
      %v378 = vunpack.c.l.b16 %v339
      %v379 = vunpack.c.l.b16 %v340
      %v380 = vunpack.c.l.b16 %v341
      %v381 = vunpack.c.l.b16 %v342
      %v382 = vunpack.c.l.b16 %v343
      %v383 = vunpack.c.l.b16 %v344
      %v384 = vunpack.c.l.b16 %v345
      %v385 = vunpack.c.l.b16 %v346
      %v386 = vunpack.c.l.b16 %v347
      %v387 = vunpack.c.l.b16 %v348
      %v388 = vunpack.c.l.b16 %v349
      %v389 = vunpack.c.l.b16 %v350
      %v390 = vpack.c.b16 %v375, %v374
      %v391 = vpack.c.b16 %v377, %v376
      %v392 = vpack.c.b16 %v379, %v378
      %v393 = vpack.c.b16 %v381, %v380
      %v394 = vpack.c.b16 %v383, %v382
      %v395 = vpack.c.b16 %v385, %v384
      %v396 = vpack.c.b16 %v387, %v386
      %v397 = vpack.c.b16 %v389, %v388
      %406 = vmatprep.subr.bf16.mxu0 0
      %407 = vmatpush1.bf16.msra.mxu0 %v397
      %408 = vmatprep.subr.bf16.mxu0 0
      %409 = vmatpush1.bf16.msra.mxu0 %v396
      %410 = vmatprep.subr.bf16.mxu0 0
      %411 = vmatpush1.bf16.msra.mxu0 %v395
      %412 = vmatprep.subr.bf16.mxu0 0
      %413 = vmatpush1.bf16.msra.mxu0 %v394
      %414 = vmatprep.subr.bf16.mxu0 0
      %415 = vmatpush1.bf16.msra.mxu0 %v393
      %416 = vmatprep.subr.bf16.mxu0 0
      %417 = vmatpush1.bf16.msra.mxu0 %v392
      %418 = vmatprep.subr.bf16.mxu0 0
      %419 = vmatpush1.bf16.msra.mxu0 %v391
      %420 = vmatprep.subr.bf16.mxu0 0
      %421 = vmatpush1.bf16.msra.mxu0 %v390
      %422 = vmatprep.subr.bf16.mxu0 0
      %423 = vmatpush2.bf16.msra.mxu0 0
      %424 = vmatprep.subr.bf16.mxu0 0
      %425 = vmatpush2.bf16.msra.mxu0 0
      %426 = vmatprep.subr.bf16.mxu0 0
      %427 = vmatpush2.bf16.msra.mxu0 0
      %428 = vmatprep.subr.bf16.mxu0 0
      %429 = vmatpush2.bf16.msra.mxu0 0
      %430 = vmatprep.subr.bf16.mxu0 0
      %431 = vmatpush2.bf16.msra.mxu0 0
      %432 = vmatprep.subr.bf16.mxu0 0
      %433 = vmatpush2.bf16.msra.mxu0 0
      %434 = vmatprep.subr.bf16.mxu0 0
      %435 = vmatpush2.bf16.msra.mxu0 0
      %436 = vmatprep.subr.bf16.mxu0 0
      %437 = vmatpush2.bf16.msra.mxu0 0
      %438 = vmatprep.mubr.bf16.mxu0 0
      %439 = vmatmul.mubr.bf16.gmra.mxu0 %v333
      %v440 = vpop.f32.mrf.mxu0
      %v441 = vadd.f32 %v356, %v440
      %v442 = vpop.f32.mrf.mxu0
      %v443 = vpop.f32.mrf.mxu0
      %v444 = vadd.f32 %v356, %v443
      %v445 = vpop.f32.mrf.mxu0
      %446 = vmatprep.mubr.bf16.mxu0 0
      %447 = vmatmul.mubr.bf16.gmra.mxu0 %v334
      %v448 = vpop.f32.mrf.mxu0
      %v449 = vadd.f32 %v356, %v448
      %v450 = vpop.f32.mrf.mxu0
      %v451 = vpop.f32.mrf.mxu0
      %v452 = vadd.f32 %v356, %v451
      %v453 = vpop.f32.mrf.mxu0
      %454 = vdwg.mxu0
      %v455 = vmul.f32 %v441, 0.2
      %v456 = vmul.f32 %v444, 0.2
      %v457 = vmul.f32 %v449, 0.2
      %v458 = vmul.f32 %v452, 0.2
      %v459 = vmax.f32 %v441, %v455
      %v460 = vmax.f32 %v444, %v456
      %v461 = vmax.f32 %v449, %v457
      %v462 = vmax.f32 %v452, %v458
      %v463 = vpack.c.bf16 %v460, %v459
      %v464 = vpack.c.bf16 %v462, %v461
      %s465 = scalar_lea.vmem %s2, 64
      %v466 = vld [vmem:[%s465] sm:$0xf]
      %v467 = vld [vmem:[%s465 + $0x4] sm:$0xf]
      %v468 = vld [vmem:[%s465 + $0x8] sm:$0xf]
      %v469 = vld [vmem:[%s465 + $0xc] sm:$0xf]
      %v470 = vld [vmem:[%s465 + $0x10] sm:$0xf]
      %v471 = vld [vmem:[%s465 + $0x14] sm:$0xf]
      %v472 = vld [vmem:[%s465 + $0x18] sm:$0xf]
      %v473 = vld [vmem:[%s465 + $0x1c] sm:$0xf]
      %v474 = vld [vmem:[%s465 + $0x20] sm:$0xf]
      %v475 = vld [vmem:[%s465 + $0x24] sm:$0xf]
      %v476 = vld [vmem:[%s465 + $0x28] sm:$0xf]
      %v477 = vld [vmem:[%s465 + $0x2c] sm:$0xf]
      %v478 = vld [vmem:[%s465 + $0x30] sm:$0xf]
      %v479 = vld [vmem:[%s465 + $0x34] sm:$0xf]
      %v480 = vld [vmem:[%s465 + $0x38] sm:$0xf]
      %v481 = vld [vmem:[%s465 + $0x3c] sm:$0xf]
      %s482 = scalar_lea.vmem %s3, 1
      %v483 = vld [vmem:[%s482] sm:$0x1]
      %v485 = vlaneseq
      %v486 = vshrl.u32 %v485, 7
      %v487 = vsub.s32 0, %v486
      %v488 = vrot.slane %v483, %v487
      %v506 = vunpack.c.l.b16 %v466
      %v507 = vunpack.c.l.b16 %v467
      %v508 = vunpack.c.l.b16 %v468
      %v509 = vunpack.c.l.b16 %v469
      %v510 = vunpack.c.l.b16 %v470
      %v511 = vunpack.c.l.b16 %v471
      %v512 = vunpack.c.l.b16 %v472
      %v513 = vunpack.c.l.b16 %v473
      %v514 = vunpack.c.l.b16 %v474
      %v515 = vunpack.c.l.b16 %v475
      %v516 = vunpack.c.l.b16 %v476
      %v517 = vunpack.c.l.b16 %v477
      %v518 = vunpack.c.l.b16 %v478
      %v519 = vunpack.c.l.b16 %v479
      %v520 = vunpack.c.l.b16 %v480
      %v521 = vunpack.c.l.b16 %v481
      %v522 = vpack.c.b16 %v507, %v506
      %v523 = vpack.c.b16 %v509, %v508
      %v524 = vpack.c.b16 %v511, %v510
      %v525 = vpack.c.b16 %v513, %v512
      %v526 = vpack.c.b16 %v515, %v514
      %v527 = vpack.c.b16 %v517, %v516
      %v528 = vpack.c.b16 %v519, %v518
      %v529 = vpack.c.b16 %v521, %v520
      %538 = vmatprep.subr.bf16.mxu0 0
      %539 = vmatpush1.bf16.msra.mxu0 %v529
      %540 = vmatprep.subr.bf16.mxu0 0
      %541 = vmatpush1.bf16.msra.mxu0 %v528
      %542 = vmatprep.subr.bf16.mxu0 0
      %543 = vmatpush1.bf16.msra.mxu0 %v527
      %544 = vmatprep.subr.bf16.mxu0 0
      %545 = vmatpush1.bf16.msra.mxu0 %v526
      %546 = vmatprep.subr.bf16.mxu0 0
      %547 = vmatpush1.bf16.msra.mxu0 %v525
      %548 = vmatprep.subr.bf16.mxu0 0
      %549 = vmatpush1.bf16.msra.mxu0 %v524
      %550 = vmatprep.subr.bf16.mxu0 0
      %551 = vmatpush1.bf16.msra.mxu0 %v523
      %552 = vmatprep.subr.bf16.mxu0 0
      %553 = vmatpush1.bf16.msra.mxu0 %v522
      %554 = vmatprep.subr.bf16.mxu0 0
      %555 = vmatpush2.bf16.msra.mxu0 0
      %556 = vmatprep.subr.bf16.mxu0 0
      %557 = vmatpush2.bf16.msra.mxu0 0
      %558 = vmatprep.subr.bf16.mxu0 0
      %559 = vmatpush2.bf16.msra.mxu0 0
      %560 = vmatprep.subr.bf16.mxu0 0
      %561 = vmatpush2.bf16.msra.mxu0 0
      %562 = vmatprep.subr.bf16.mxu0 0
      %563 = vmatpush2.bf16.msra.mxu0 0
      %564 = vmatprep.subr.bf16.mxu0 0
      %565 = vmatpush2.bf16.msra.mxu0 0
      %566 = vmatprep.subr.bf16.mxu0 0
      %567 = vmatpush2.bf16.msra.mxu0 0
      %568 = vmatprep.subr.bf16.mxu0 0
      %569 = vmatpush2.bf16.msra.mxu0 0
      %570 = vmatprep.mubr.bf16.mxu0 0
      %571 = vmatmul.mubr.bf16.gmra.mxu0 %v463
      %v572 = vpop.f32.mrf.mxu0
      %v573 = vadd.f32 %v488, %v572
      %v574 = vpop.f32.mrf.mxu0
      %v575 = vpop.f32.mrf.mxu0
      %v576 = vadd.f32 %v488, %v575
      %v577 = vpop.f32.mrf.mxu0
      %578 = vmatprep.mubr.bf16.mxu0 0
      %579 = vmatmul.mubr.bf16.gmra.mxu0 %v464
      %v580 = vpop.f32.mrf.mxu0
      %v581 = vadd.f32 %v488, %v580
      %v582 = vpop.f32.mrf.mxu0
      %v583 = vpop.f32.mrf.mxu0
      %v584 = vadd.f32 %v488, %v583
      %v585 = vpop.f32.mrf.mxu0
      %586 = vdwg.mxu0
      %v587 = vmul.f32 %v573, 0.2
      %v588 = vmul.f32 %v576, 0.2
      %v589 = vmul.f32 %v581, 0.2
      %v590 = vmul.f32 %v584, 0.2
      %v591 = vmax.f32 %v573, %v587
      %v592 = vmax.f32 %v576, %v588
      %v593 = vmax.f32 %v581, %v589
      %v594 = vmax.f32 %v584, %v590
      %v595 = vpack.c.bf16 %v592, %v591
      %v596 = vpack.c.bf16 %v594, %v593
      %s597 = scalar_lea.vmem %s2, 128
      %v598 = vld [vmem:[%s597] sm:$0xf]
      %v599 = vld [vmem:[%s597 + $0x4] sm:$0xf]
      %v600 = vld [vmem:[%s597 + $0x8] sm:$0xf]
      %v601 = vld [vmem:[%s597 + $0xc] sm:$0xf]
      %v602 = vld [vmem:[%s597 + $0x10] sm:$0xf]
      %v603 = vld [vmem:[%s597 + $0x14] sm:$0xf]
      %v604 = vld [vmem:[%s597 + $0x18] sm:$0xf]
      %v605 = vld [vmem:[%s597 + $0x1c] sm:$0xf]
      %v606 = vld [vmem:[%s597 + $0x20] sm:$0xf]
      %v607 = vld [vmem:[%s597 + $0x24] sm:$0xf]
      %v608 = vld [vmem:[%s597 + $0x28] sm:$0xf]
      %v609 = vld [vmem:[%s597 + $0x2c] sm:$0xf]
      %v610 = vld [vmem:[%s597 + $0x30] sm:$0xf]
      %v611 = vld [vmem:[%s597 + $0x34] sm:$0xf]
      %v612 = vld [vmem:[%s597 + $0x38] sm:$0xf]
      %v613 = vld [vmem:[%s597 + $0x3c] sm:$0xf]
      %s614 = scalar_lea.vmem %s3, 2
      %v615 = vld [vmem:[%s614] sm:$0x1]
      %v617 = vlaneseq
      %v618 = vshrl.u32 %v617, 7
      %v619 = vsub.s32 0, %v618
      %v620 = vrot.slane %v615, %v619
      %v638 = vunpack.c.l.b16 %v598
      %v639 = vunpack.c.l.b16 %v599
      %v640 = vunpack.c.l.b16 %v600
      %v641 = vunpack.c.l.b16 %v601
      %v642 = vunpack.c.l.b16 %v602
      %v643 = vunpack.c.l.b16 %v603
      %v644 = vunpack.c.l.b16 %v604
      %v645 = vunpack.c.l.b16 %v605
      %v646 = vunpack.c.l.b16 %v606
      %v647 = vunpack.c.l.b16 %v607
      %v648 = vunpack.c.l.b16 %v608
      %v649 = vunpack.c.l.b16 %v609
      %v650 = vunpack.c.l.b16 %v610
      %v651 = vunpack.c.l.b16 %v611
      %v652 = vunpack.c.l.b16 %v612
      %v653 = vunpack.c.l.b16 %v613
      %v654 = vpack.c.b16 %v639, %v638
      %v655 = vpack.c.b16 %v641, %v640
      %v656 = vpack.c.b16 %v643, %v642
      %v657 = vpack.c.b16 %v645, %v644
      %v658 = vpack.c.b16 %v647, %v646
      %v659 = vpack.c.b16 %v649, %v648
      %v660 = vpack.c.b16 %v651, %v650
      %v661 = vpack.c.b16 %v653, %v652
      %670 = vmatprep.subr.bf16.mxu0 0
      %671 = vmatpush1.bf16.msra.mxu0 %v661
      %672 = vmatprep.subr.bf16.mxu0 0
      %673 = vmatpush1.bf16.msra.mxu0 %v660
      %674 = vmatprep.subr.bf16.mxu0 0
      %675 = vmatpush1.bf16.msra.mxu0 %v659
      %676 = vmatprep.subr.bf16.mxu0 0
      %677 = vmatpush1.bf16.msra.mxu0 %v658
      %678 = vmatprep.subr.bf16.mxu0 0
      %679 = vmatpush1.bf16.msra.mxu0 %v657
      %680 = vmatprep.subr.bf16.mxu0 0
      %681 = vmatpush1.bf16.msra.mxu0 %v656
      %682 = vmatprep.subr.bf16.mxu0 0
      %683 = vmatpush1.bf16.msra.mxu0 %v655
      %684 = vmatprep.subr.bf16.mxu0 0
      %685 = vmatpush1.bf16.msra.mxu0 %v654
      %686 = vmatprep.subr.bf16.mxu0 0
      %687 = vmatpush2.bf16.msra.mxu0 0
      %688 = vmatprep.subr.bf16.mxu0 0
      %689 = vmatpush2.bf16.msra.mxu0 0
      %690 = vmatprep.subr.bf16.mxu0 0
      %691 = vmatpush2.bf16.msra.mxu0 0
      %692 = vmatprep.subr.bf16.mxu0 0
      %693 = vmatpush2.bf16.msra.mxu0 0
      %694 = vmatprep.subr.bf16.mxu0 0
      %695 = vmatpush2.bf16.msra.mxu0 0
      %696 = vmatprep.subr.bf16.mxu0 0
      %697 = vmatpush2.bf16.msra.mxu0 0
      %698 = vmatprep.subr.bf16.mxu0 0
      %699 = vmatpush2.bf16.msra.mxu0 0
      %700 = vmatprep.subr.bf16.mxu0 0
      %701 = vmatpush2.bf16.msra.mxu0 0
      %702 = vmatprep.mubr.bf16.mxu0 0
      %703 = vmatmul.mubr.bf16.gmra.mxu0 %v595
      %v704 = vpop.f32.mrf.mxu0
      %v705 = vadd.f32 %v620, %v704
      %v706 = vpop.f32.mrf.mxu0
      %v707 = vpop.f32.mrf.mxu0
      %v708 = vadd.f32 %v620, %v707
      %v709 = vpop.f32.mrf.mxu0
      %710 = vmatprep.mubr.bf16.mxu0 0
      %711 = vmatmul.mubr.bf16.gmra.mxu0 %v596
      %v712 = vpop.f32.mrf.mxu0
      %v713 = vadd.f32 %v620, %v712
      %v714 = vpop.f32.mrf.mxu0
      %v715 = vpop.f32.mrf.mxu0
      %v716 = vadd.f32 %v620, %v715
      %v717 = vpop.f32.mrf.mxu0
      %718 = vdwg.mxu0
      %v719 = vmul.f32 %v705, 0.2
      %v720 = vmul.f32 %v708, 0.2
      %v721 = vmul.f32 %v713, 0.2
      %v722 = vmul.f32 %v716, 0.2
      %v723 = vmax.f32 %v705, %v719
      %v724 = vmax.f32 %v708, %v720
      %v725 = vmax.f32 %v713, %v721
      %v726 = vmax.f32 %v716, %v722
      %v727 = vpack.c.bf16 %v724, %v723
      %v728 = vpack.c.bf16 %v726, %v725
      %s729 = scalar_lea.vmem %s2, 192
      %v730 = vld [vmem:[%s729] sm:$0xf]
      %v731 = vld [vmem:[%s729 + $0x4] sm:$0xf]
      %v732 = vld [vmem:[%s729 + $0x8] sm:$0xf]
      %v733 = vld [vmem:[%s729 + $0xc] sm:$0xf]
      %v734 = vld [vmem:[%s729 + $0x10] sm:$0xf]
      %v735 = vld [vmem:[%s729 + $0x14] sm:$0xf]
      %v736 = vld [vmem:[%s729 + $0x18] sm:$0xf]
      %v737 = vld [vmem:[%s729 + $0x1c] sm:$0xf]
      %v738 = vld [vmem:[%s729 + $0x20] sm:$0xf]
      %v739 = vld [vmem:[%s729 + $0x24] sm:$0xf]
      %v740 = vld [vmem:[%s729 + $0x28] sm:$0xf]
      %v741 = vld [vmem:[%s729 + $0x2c] sm:$0xf]
      %v742 = vld [vmem:[%s729 + $0x30] sm:$0xf]
      %v743 = vld [vmem:[%s729 + $0x34] sm:$0xf]
      %v744 = vld [vmem:[%s729 + $0x38] sm:$0xf]
      %v745 = vld [vmem:[%s729 + $0x3c] sm:$0xf]
      %s746 = scalar_lea.vmem %s3, 3
      %v747 = vld [vmem:[%s746] sm:$0x1]
      %v749 = vlaneseq
      %v750 = vshrl.u32 %v749, 7
      %v751 = vsub.s32 0, %v750
      %v752 = vrot.slane %v747, %v751
      %v770 = vunpack.c.l.b16 %v730
      %v771 = vunpack.c.l.b16 %v731
      %v772 = vunpack.c.l.b16 %v732
      %v773 = vunpack.c.l.b16 %v733
      %v774 = vunpack.c.l.b16 %v734
      %v775 = vunpack.c.l.b16 %v735
      %v776 = vunpack.c.l.b16 %v736
      %v777 = vunpack.c.l.b16 %v737
      %v778 = vunpack.c.l.b16 %v738
      %v779 = vunpack.c.l.b16 %v739
      %v780 = vunpack.c.l.b16 %v740
      %v781 = vunpack.c.l.b16 %v741
      %v782 = vunpack.c.l.b16 %v742
      %v783 = vunpack.c.l.b16 %v743
      %v784 = vunpack.c.l.b16 %v744
      %v785 = vunpack.c.l.b16 %v745
      %v786 = vpack.c.b16 %v771, %v770
      %v787 = vpack.c.b16 %v773, %v772
      %v788 = vpack.c.b16 %v775, %v774
      %v789 = vpack.c.b16 %v777, %v776
      %v790 = vpack.c.b16 %v779, %v778
      %v791 = vpack.c.b16 %v781, %v780
      %v792 = vpack.c.b16 %v783, %v782
      %v793 = vpack.c.b16 %v785, %v784
      %802 = vmatprep.subr.bf16.mxu0 0
      %803 = vmatpush1.bf16.msra.mxu0 %v793
      %804 = vmatprep.subr.bf16.mxu0 0
      %805 = vmatpush1.bf16.msra.mxu0 %v792
      %806 = vmatprep.subr.bf16.mxu0 0
      %807 = vmatpush1.bf16.msra.mxu0 %v791
      %808 = vmatprep.subr.bf16.mxu0 0
      %809 = vmatpush1.bf16.msra.mxu0 %v790
      %810 = vmatprep.subr.bf16.mxu0 0
      %811 = vmatpush1.bf16.msra.mxu0 %v789
      %812 = vmatprep.subr.bf16.mxu0 0
      %813 = vmatpush1.bf16.msra.mxu0 %v788
      %814 = vmatprep.subr.bf16.mxu0 0
      %815 = vmatpush1.bf16.msra.mxu0 %v787
      %816 = vmatprep.subr.bf16.mxu0 0
      %817 = vmatpush1.bf16.msra.mxu0 %v786
      %818 = vmatprep.subr.bf16.mxu0 0
      %819 = vmatpush2.bf16.msra.mxu0 0
      %820 = vmatprep.subr.bf16.mxu0 0
      %821 = vmatpush2.bf16.msra.mxu0 0
      %822 = vmatprep.subr.bf16.mxu0 0
      %823 = vmatpush2.bf16.msra.mxu0 0
      %824 = vmatprep.subr.bf16.mxu0 0
      %825 = vmatpush2.bf16.msra.mxu0 0
      %826 = vmatprep.subr.bf16.mxu0 0
      %827 = vmatpush2.bf16.msra.mxu0 0
      %828 = vmatprep.subr.bf16.mxu0 0
      %829 = vmatpush2.bf16.msra.mxu0 0
      %830 = vmatprep.subr.bf16.mxu0 0
      %831 = vmatpush2.bf16.msra.mxu0 0
      %832 = vmatprep.subr.bf16.mxu0 0
      %833 = vmatpush2.bf16.msra.mxu0 0
      %834 = vmatprep.mubr.bf16.mxu0 0
      %835 = vmatmul.mubr.bf16.gmra.mxu0 %v727
      %v836 = vpop.f32.mrf.mxu0
      %v837 = vadd.f32 %v752, %v836
      %v838 = vpop.f32.mrf.mxu0
      %v839 = vpop.f32.mrf.mxu0
      %v840 = vadd.f32 %v752, %v839
      %v841 = vpop.f32.mrf.mxu0
      %842 = vmatprep.mubr.bf16.mxu0 0
      %843 = vmatmul.mubr.bf16.gmra.mxu0 %v728
      %v844 = vpop.f32.mrf.mxu0
      %v845 = vadd.f32 %v752, %v844
      %v846 = vpop.f32.mrf.mxu0
      %v847 = vpop.f32.mrf.mxu0
      %v848 = vadd.f32 %v752, %v847
      %v849 = vpop.f32.mrf.mxu0
      %850 = vdwg.mxu0
      %v851 = vmul.f32 %v837, 0.2
      %v852 = vmul.f32 %v840, 0.2
      %v853 = vmul.f32 %v845, 0.2
      %v854 = vmul.f32 %v848, 0.2
      %v855 = vmax.f32 %v837, %v851
      %v856 = vmax.f32 %v840, %v852
      %v857 = vmax.f32 %v845, %v853
      %v858 = vmax.f32 %v848, %v854
      %v859 = vpack.c.bf16 %v856, %v855
      %v860 = vpack.c.bf16 %v858, %v857
      %s861 = scalar_lea.vmem %s2, 256
      %v862 = vld [vmem:[%s861] sm:$0xf]
      %v863 = vld [vmem:[%s861 + $0x4] sm:$0xf]
      %v864 = vld [vmem:[%s861 + $0x8] sm:$0xf]
      %v865 = vld [vmem:[%s861 + $0xc] sm:$0xf]
      %v866 = vld [vmem:[%s861 + $0x10] sm:$0xf]
      %v867 = vld [vmem:[%s861 + $0x14] sm:$0xf]
      %v868 = vld [vmem:[%s861 + $0x18] sm:$0xf]
      %v869 = vld [vmem:[%s861 + $0x1c] sm:$0xf]
      %v870 = vld [vmem:[%s861 + $0x20] sm:$0xf]
      %v871 = vld [vmem:[%s861 + $0x24] sm:$0xf]
      %v872 = vld [vmem:[%s861 + $0x28] sm:$0xf]
      %v873 = vld [vmem:[%s861 + $0x2c] sm:$0xf]
      %v874 = vld [vmem:[%s861 + $0x30] sm:$0xf]
      %v875 = vld [vmem:[%s861 + $0x34] sm:$0xf]
      %v876 = vld [vmem:[%s861 + $0x38] sm:$0xf]
      %v877 = vld [vmem:[%s861 + $0x3c] sm:$0xf]
      %s878 = scalar_lea.vmem %s3, 4
      %v879 = vld [vmem:[%s878] sm:$0x1]
      %v881 = vlaneseq
      %v882 = vshrl.u32 %v881, 7
      %v883 = vsub.s32 0, %v882
      %v884 = vrot.slane %v879, %v883
      %v902 = vunpack.c.l.b16 %v862
      %v903 = vunpack.c.l.b16 %v863
      %v904 = vunpack.c.l.b16 %v864
      %v905 = vunpack.c.l.b16 %v865
      %v906 = vunpack.c.l.b16 %v866
      %v907 = vunpack.c.l.b16 %v867
      %v908 = vunpack.c.l.b16 %v868
      %v909 = vunpack.c.l.b16 %v869
      %v910 = vunpack.c.l.b16 %v870
      %v911 = vunpack.c.l.b16 %v871
      %v912 = vunpack.c.l.b16 %v872
      %v913 = vunpack.c.l.b16 %v873
      %v914 = vunpack.c.l.b16 %v874
      %v915 = vunpack.c.l.b16 %v875
      %v916 = vunpack.c.l.b16 %v876
      %v917 = vunpack.c.l.b16 %v877
      %v918 = vpack.c.b16 %v903, %v902
      %v919 = vpack.c.b16 %v905, %v904
      %v920 = vpack.c.b16 %v907, %v906
      %v921 = vpack.c.b16 %v909, %v908
      %v922 = vpack.c.b16 %v911, %v910
      %v923 = vpack.c.b16 %v913, %v912
      %v924 = vpack.c.b16 %v915, %v914
      %v925 = vpack.c.b16 %v917, %v916
      %934 = vmatprep.subr.bf16.mxu0 0
      %935 = vmatpush1.bf16.msra.mxu0 %v925
      %936 = vmatprep.subr.bf16.mxu0 0
      %937 = vmatpush1.bf16.msra.mxu0 %v924
      %938 = vmatprep.subr.bf16.mxu0 0
      %939 = vmatpush1.bf16.msra.mxu0 %v923
      %940 = vmatprep.subr.bf16.mxu0 0
      %941 = vmatpush1.bf16.msra.mxu0 %v922
      %942 = vmatprep.subr.bf16.mxu0 0
      %943 = vmatpush1.bf16.msra.mxu0 %v921
      %944 = vmatprep.subr.bf16.mxu0 0
      %945 = vmatpush1.bf16.msra.mxu0 %v920
      %946 = vmatprep.subr.bf16.mxu0 0
      %947 = vmatpush1.bf16.msra.mxu0 %v919
      %948 = vmatprep.subr.bf16.mxu0 0
      %949 = vmatpush1.bf16.msra.mxu0 %v918
      %950 = vmatprep.subr.bf16.mxu0 0
      %951 = vmatpush2.bf16.msra.mxu0 0
      %952 = vmatprep.subr.bf16.mxu0 0
      %953 = vmatpush2.bf16.msra.mxu0 0
      %954 = vmatprep.subr.bf16.mxu0 0
      %955 = vmatpush2.bf16.msra.mxu0 0
      %956 = vmatprep.subr.bf16.mxu0 0
      %957 = vmatpush2.bf16.msra.mxu0 0
      %958 = vmatprep.subr.bf16.mxu0 0
      %959 = vmatpush2.bf16.msra.mxu0 0
      %960 = vmatprep.subr.bf16.mxu0 0
      %961 = vmatpush2.bf16.msra.mxu0 0
      %962 = vmatprep.subr.bf16.mxu0 0
      %963 = vmatpush2.bf16.msra.mxu0 0
      %964 = vmatprep.subr.bf16.mxu0 0
      %965 = vmatpush2.bf16.msra.mxu0 0
      %966 = vmatprep.mubr.bf16.mxu0 0
      %967 = vmatmul.mubr.bf16.gmra.mxu0 %v859
      %v968 = vpop.f32.mrf.mxu0
      %v969 = vadd.f32 %v884, %v968
      %v970 = vpop.f32.mrf.mxu0
      %v971 = vpop.f32.mrf.mxu0
      %v972 = vadd.f32 %v884, %v971
      %v973 = vpop.f32.mrf.mxu0
      %974 = vmatprep.mubr.bf16.mxu0 0
      %975 = vmatmul.mubr.bf16.gmra.mxu0 %v860
      %v976 = vpop.f32.mrf.mxu0
      %v977 = vadd.f32 %v884, %v976
      %v978 = vpop.f32.mrf.mxu0
      %v979 = vpop.f32.mrf.mxu0
      %v980 = vadd.f32 %v884, %v979
      %v981 = vpop.f32.mrf.mxu0
      %982 = vdwg.mxu0
      %v983 = vmul.f32 %v969, 0.2
      %v984 = vmul.f32 %v972, 0.2
      %v985 = vmul.f32 %v977, 0.2
      %v986 = vmul.f32 %v980, 0.2
      %v987 = vmax.f32 %v969, %v983
      %v988 = vmax.f32 %v972, %v984
      %v989 = vmax.f32 %v977, %v985
      %v990 = vmax.f32 %v980, %v986
      %v991 = vpack.c.bf16 %v988, %v987
      %v992 = vpack.c.bf16 %v990, %v989
      %s993 = scalar_lea.vmem %s2, 320
      %v994 = vld [vmem:[%s993] sm:$0xf]
      %v995 = vld [vmem:[%s993 + $0x4] sm:$0xf]
      %v996 = vld [vmem:[%s993 + $0x8] sm:$0xf]
      %v997 = vld [vmem:[%s993 + $0xc] sm:$0xf]
      %v998 = vld [vmem:[%s993 + $0x10] sm:$0xf]
      %v999 = vld [vmem:[%s993 + $0x14] sm:$0xf]
      %v1000 = vld [vmem:[%s993 + $0x18] sm:$0xf]
      %v1001 = vld [vmem:[%s993 + $0x1c] sm:$0xf]
      %v1002 = vld [vmem:[%s993 + $0x20] sm:$0xf]
      %v1003 = vld [vmem:[%s993 + $0x24] sm:$0xf]
      %v1004 = vld [vmem:[%s993 + $0x28] sm:$0xf]
      %v1005 = vld [vmem:[%s993 + $0x2c] sm:$0xf]
      %v1006 = vld [vmem:[%s993 + $0x30] sm:$0xf]
      %v1007 = vld [vmem:[%s993 + $0x34] sm:$0xf]
      %v1008 = vld [vmem:[%s993 + $0x38] sm:$0xf]
      %v1009 = vld [vmem:[%s993 + $0x3c] sm:$0xf]
      %s1010 = scalar_lea.vmem %s3, 5
      %v1011 = vld [vmem:[%s1010] sm:$0x1]
      %v1013 = vlaneseq
      %v1014 = vshrl.u32 %v1013, 7
      %v1015 = vsub.s32 0, %v1014
      %v1016 = vrot.slane %v1011, %v1015
      %v1034 = vunpack.c.l.b16 %v994
      %v1035 = vunpack.c.l.b16 %v995
      %v1036 = vunpack.c.l.b16 %v996
      %v1037 = vunpack.c.l.b16 %v997
      %v1038 = vunpack.c.l.b16 %v998
      %v1039 = vunpack.c.l.b16 %v999
      %v1040 = vunpack.c.l.b16 %v1000
      %v1041 = vunpack.c.l.b16 %v1001
      %v1042 = vunpack.c.l.b16 %v1002
      %v1043 = vunpack.c.l.b16 %v1003
      %v1044 = vunpack.c.l.b16 %v1004
      %v1045 = vunpack.c.l.b16 %v1005
      %v1046 = vunpack.c.l.b16 %v1006
      %v1047 = vunpack.c.l.b16 %v1007
      %v1048 = vunpack.c.l.b16 %v1008
      %v1049 = vunpack.c.l.b16 %v1009
      %v1050 = vpack.c.b16 %v1035, %v1034
      %v1051 = vpack.c.b16 %v1037, %v1036
      %v1052 = vpack.c.b16 %v1039, %v1038
      %v1053 = vpack.c.b16 %v1041, %v1040
      %v1054 = vpack.c.b16 %v1043, %v1042
      %v1055 = vpack.c.b16 %v1045, %v1044
      %v1056 = vpack.c.b16 %v1047, %v1046
      %v1057 = vpack.c.b16 %v1049, %v1048
      %1066 = vmatprep.subr.bf16.mxu0 0
      %1067 = vmatpush1.bf16.msra.mxu0 %v1057
      %1068 = vmatprep.subr.bf16.mxu0 0
      %1069 = vmatpush1.bf16.msra.mxu0 %v1056
      %1070 = vmatprep.subr.bf16.mxu0 0
      %1071 = vmatpush1.bf16.msra.mxu0 %v1055
      %1072 = vmatprep.subr.bf16.mxu0 0
      %1073 = vmatpush1.bf16.msra.mxu0 %v1054
      %1074 = vmatprep.subr.bf16.mxu0 0
      %1075 = vmatpush1.bf16.msra.mxu0 %v1053
      %1076 = vmatprep.subr.bf16.mxu0 0
      %1077 = vmatpush1.bf16.msra.mxu0 %v1052
      %1078 = vmatprep.subr.bf16.mxu0 0
      %1079 = vmatpush1.bf16.msra.mxu0 %v1051
      %1080 = vmatprep.subr.bf16.mxu0 0
      %1081 = vmatpush1.bf16.msra.mxu0 %v1050
      %1082 = vmatprep.subr.bf16.mxu0 0
      %1083 = vmatpush2.bf16.msra.mxu0 0
      %1084 = vmatprep.subr.bf16.mxu0 0
      %1085 = vmatpush2.bf16.msra.mxu0 0
      %1086 = vmatprep.subr.bf16.mxu0 0
      %1087 = vmatpush2.bf16.msra.mxu0 0
      %1088 = vmatprep.subr.bf16.mxu0 0
      %1089 = vmatpush2.bf16.msra.mxu0 0
      %1090 = vmatprep.subr.bf16.mxu0 0
      %1091 = vmatpush2.bf16.msra.mxu0 0
      %1092 = vmatprep.subr.bf16.mxu0 0
      %1093 = vmatpush2.bf16.msra.mxu0 0
      %1094 = vmatprep.subr.bf16.mxu0 0
      %1095 = vmatpush2.bf16.msra.mxu0 0
      %1096 = vmatprep.subr.bf16.mxu0 0
      %1097 = vmatpush2.bf16.msra.mxu0 0
      %1098 = vmatprep.mubr.bf16.mxu0 0
      %1099 = vmatmul.mubr.bf16.gmra.mxu0 %v991
      %v1100 = vpop.f32.mrf.mxu0
      %v1101 = vadd.f32 %v1016, %v1100
      %v1102 = vpop.f32.mrf.mxu0
      %v1103 = vpop.f32.mrf.mxu0
      %v1104 = vadd.f32 %v1016, %v1103
      %v1105 = vpop.f32.mrf.mxu0
      %1106 = vmatprep.mubr.bf16.mxu0 0
      %1107 = vmatmul.mubr.bf16.gmra.mxu0 %v992
      %v1108 = vpop.f32.mrf.mxu0
      %v1109 = vadd.f32 %v1016, %v1108
      %v1110 = vpop.f32.mrf.mxu0
      %v1111 = vpop.f32.mrf.mxu0
      %v1112 = vadd.f32 %v1016, %v1111
      %v1113 = vpop.f32.mrf.mxu0
      %1114 = vdwg.mxu0
      %v1115 = vmul.f32 %v1101, 0.2
      %v1116 = vmul.f32 %v1104, 0.2
      %v1117 = vmul.f32 %v1109, 0.2
      %v1118 = vmul.f32 %v1112, 0.2
      %v1119 = vmax.f32 %v1101, %v1115
      %v1120 = vmax.f32 %v1104, %v1116
      %v1121 = vmax.f32 %v1109, %v1117
      %v1122 = vmax.f32 %v1112, %v1118
      %v1123 = vpack.c.bf16 %v1120, %v1119
      %v1124 = vpack.c.bf16 %v1122, %v1121
      %s1125 = scalar_lea.vmem %s2, 384
      %v1126 = vld [vmem:[%s1125] sm:$0xf]
      %v1127 = vld [vmem:[%s1125 + $0x4] sm:$0xf]
      %v1128 = vld [vmem:[%s1125 + $0x8] sm:$0xf]
      %v1129 = vld [vmem:[%s1125 + $0xc] sm:$0xf]
      %v1130 = vld [vmem:[%s1125 + $0x10] sm:$0xf]
      %v1131 = vld [vmem:[%s1125 + $0x14] sm:$0xf]
      %v1132 = vld [vmem:[%s1125 + $0x18] sm:$0xf]
      %v1133 = vld [vmem:[%s1125 + $0x1c] sm:$0xf]
      %v1134 = vld [vmem:[%s1125 + $0x20] sm:$0xf]
      %v1135 = vld [vmem:[%s1125 + $0x24] sm:$0xf]
      %v1136 = vld [vmem:[%s1125 + $0x28] sm:$0xf]
      %v1137 = vld [vmem:[%s1125 + $0x2c] sm:$0xf]
      %v1138 = vld [vmem:[%s1125 + $0x30] sm:$0xf]
      %v1139 = vld [vmem:[%s1125 + $0x34] sm:$0xf]
      %v1140 = vld [vmem:[%s1125 + $0x38] sm:$0xf]
      %v1141 = vld [vmem:[%s1125 + $0x3c] sm:$0xf]
      %s1142 = scalar_lea.vmem %s3, 6
      %v1143 = vld [vmem:[%s1142] sm:$0x1]
      %v1145 = vlaneseq
      %v1146 = vshrl.u32 %v1145, 7
      %v1147 = vsub.s32 0, %v1146
      %v1148 = vrot.slane %v1143, %v1147
      %v1166 = vunpack.c.l.b16 %v1126
      %v1167 = vunpack.c.l.b16 %v1127
      %v1168 = vunpack.c.l.b16 %v1128
      %v1169 = vunpack.c.l.b16 %v1129
      %v1170 = vunpack.c.l.b16 %v1130
      %v1171 = vunpack.c.l.b16 %v1131
      %v1172 = vunpack.c.l.b16 %v1132
      %v1173 = vunpack.c.l.b16 %v1133
      %v1174 = vunpack.c.l.b16 %v1134
      %v1175 = vunpack.c.l.b16 %v1135
      %v1176 = vunpack.c.l.b16 %v1136
      %v1177 = vunpack.c.l.b16 %v1137
      %v1178 = vunpack.c.l.b16 %v1138
      %v1179 = vunpack.c.l.b16 %v1139
      %v1180 = vunpack.c.l.b16 %v1140
      %v1181 = vunpack.c.l.b16 %v1141
      %v1182 = vpack.c.b16 %v1167, %v1166
      %v1183 = vpack.c.b16 %v1169, %v1168
      %v1184 = vpack.c.b16 %v1171, %v1170
      %v1185 = vpack.c.b16 %v1173, %v1172
      %v1186 = vpack.c.b16 %v1175, %v1174
      %v1187 = vpack.c.b16 %v1177, %v1176
      %v1188 = vpack.c.b16 %v1179, %v1178
      %v1189 = vpack.c.b16 %v1181, %v1180
      %1198 = vmatprep.subr.bf16.mxu0 0
      %1199 = vmatpush1.bf16.msra.mxu0 %v1189
      %1200 = vmatprep.subr.bf16.mxu0 0
      %1201 = vmatpush1.bf16.msra.mxu0 %v1188
      %1202 = vmatprep.subr.bf16.mxu0 0
      %1203 = vmatpush1.bf16.msra.mxu0 %v1187
      %1204 = vmatprep.subr.bf16.mxu0 0
      %1205 = vmatpush1.bf16.msra.mxu0 %v1186
      %1206 = vmatprep.subr.bf16.mxu0 0
      %1207 = vmatpush1.bf16.msra.mxu0 %v1185
      %1208 = vmatprep.subr.bf16.mxu0 0
      %1209 = vmatpush1.bf16.msra.mxu0 %v1184
      %1210 = vmatprep.subr.bf16.mxu0 0
      %1211 = vmatpush1.bf16.msra.mxu0 %v1183
      %1212 = vmatprep.subr.bf16.mxu0 0
      %1213 = vmatpush1.bf16.msra.mxu0 %v1182
      %1214 = vmatprep.subr.bf16.mxu0 0
      %1215 = vmatpush2.bf16.msra.mxu0 0
      %1216 = vmatprep.subr.bf16.mxu0 0
      %1217 = vmatpush2.bf16.msra.mxu0 0
      %1218 = vmatprep.subr.bf16.mxu0 0
      %1219 = vmatpush2.bf16.msra.mxu0 0
      %1220 = vmatprep.subr.bf16.mxu0 0
      %1221 = vmatpush2.bf16.msra.mxu0 0
      %1222 = vmatprep.subr.bf16.mxu0 0
      %1223 = vmatpush2.bf16.msra.mxu0 0
      %1224 = vmatprep.subr.bf16.mxu0 0
      %1225 = vmatpush2.bf16.msra.mxu0 0
      %1226 = vmatprep.subr.bf16.mxu0 0
      %1227 = vmatpush2.bf16.msra.mxu0 0
      %1228 = vmatprep.subr.bf16.mxu0 0
      %1229 = vmatpush2.bf16.msra.mxu0 0
      %1230 = vmatprep.mubr.bf16.mxu0 0
      %1231 = vmatmul.mubr.bf16.gmra.mxu0 %v1123
      %v1232 = vpop.f32.mrf.mxu0
      %v1233 = vadd.f32 %v1148, %v1232
      %v1234 = vpop.f32.mrf.mxu0
      %v1235 = vpop.f32.mrf.mxu0
      %v1236 = vadd.f32 %v1148, %v1235
      %v1237 = vpop.f32.mrf.mxu0
      %1238 = vmatprep.mubr.bf16.mxu0 0
      %1239 = vmatmul.mubr.bf16.gmra.mxu0 %v1124
      %v1240 = vpop.f32.mrf.mxu0
      %v1241 = vadd.f32 %v1148, %v1240
      %v1242 = vpop.f32.mrf.mxu0
      %v1243 = vpop.f32.mrf.mxu0
      %v1244 = vadd.f32 %v1148, %v1243
      %v1245 = vpop.f32.mrf.mxu0
      %1246 = vdwg.mxu0
      %v1247 = vmul.f32 %v1233, 0.2
      %v1248 = vmul.f32 %v1236, 0.2
      %v1249 = vmul.f32 %v1241, 0.2
      %v1250 = vmul.f32 %v1244, 0.2
      %v1251 = vmax.f32 %v1233, %v1247
      %v1252 = vmax.f32 %v1236, %v1248
      %v1253 = vmax.f32 %v1241, %v1249
      %v1254 = vmax.f32 %v1244, %v1250
      %v1255 = vpack.c.bf16 %v1252, %v1251
      %v1256 = vpack.c.bf16 %v1254, %v1253
      %s1257 = scalar_lea.vmem %s2, 448
      %v1258 = vld [vmem:[%s1257] sm:$0xf]
      %v1259 = vld [vmem:[%s1257 + $0x4] sm:$0xf]
      %v1260 = vld [vmem:[%s1257 + $0x8] sm:$0xf]
      %v1261 = vld [vmem:[%s1257 + $0xc] sm:$0xf]
      %v1262 = vld [vmem:[%s1257 + $0x10] sm:$0xf]
      %v1263 = vld [vmem:[%s1257 + $0x14] sm:$0xf]
      %v1264 = vld [vmem:[%s1257 + $0x18] sm:$0xf]
      %v1265 = vld [vmem:[%s1257 + $0x1c] sm:$0xf]
      %v1266 = vld [vmem:[%s1257 + $0x20] sm:$0xf]
      %v1267 = vld [vmem:[%s1257 + $0x24] sm:$0xf]
      %v1268 = vld [vmem:[%s1257 + $0x28] sm:$0xf]
      %v1269 = vld [vmem:[%s1257 + $0x2c] sm:$0xf]
      %v1270 = vld [vmem:[%s1257 + $0x30] sm:$0xf]
      %v1271 = vld [vmem:[%s1257 + $0x34] sm:$0xf]
      %v1272 = vld [vmem:[%s1257 + $0x38] sm:$0xf]
      %v1273 = vld [vmem:[%s1257 + $0x3c] sm:$0xf]
      %s1274 = scalar_lea.vmem %s3, 7
      %v1275 = vld [vmem:[%s1274] sm:$0x1]
      %v1277 = vlaneseq
      %v1278 = vshrl.u32 %v1277, 7
      %v1279 = vsub.s32 0, %v1278
      %v1280 = vrot.slane %v1275, %v1279
      %v1298 = vunpack.c.l.b16 %v1258
      %v1299 = vunpack.c.l.b16 %v1259
      %v1300 = vunpack.c.l.b16 %v1260
      %v1301 = vunpack.c.l.b16 %v1261
      %v1302 = vunpack.c.l.b16 %v1262
      %v1303 = vunpack.c.l.b16 %v1263
      %v1304 = vunpack.c.l.b16 %v1264
      %v1305 = vunpack.c.l.b16 %v1265
      %v1306 = vunpack.c.l.b16 %v1266
      %v1307 = vunpack.c.l.b16 %v1267
      %v1308 = vunpack.c.l.b16 %v1268
      %v1309 = vunpack.c.l.b16 %v1269
      %v1310 = vunpack.c.l.b16 %v1270
      %v1311 = vunpack.c.l.b16 %v1271
      %v1312 = vunpack.c.l.b16 %v1272
      %v1313 = vunpack.c.l.b16 %v1273
      %v1314 = vpack.c.b16 %v1299, %v1298
      %v1315 = vpack.c.b16 %v1301, %v1300
      %v1316 = vpack.c.b16 %v1303, %v1302
      %v1317 = vpack.c.b16 %v1305, %v1304
      %v1318 = vpack.c.b16 %v1307, %v1306
      %v1319 = vpack.c.b16 %v1309, %v1308
      %v1320 = vpack.c.b16 %v1311, %v1310
      %v1321 = vpack.c.b16 %v1313, %v1312
      %1330 = vmatprep.subr.bf16.mxu0 0
      %1331 = vmatpush1.bf16.msra.mxu0 %v1321
      %1332 = vmatprep.subr.bf16.mxu0 0
      %1333 = vmatpush1.bf16.msra.mxu0 %v1320
      %1334 = vmatprep.subr.bf16.mxu0 0
      %1335 = vmatpush1.bf16.msra.mxu0 %v1319
      %1336 = vmatprep.subr.bf16.mxu0 0
      %1337 = vmatpush1.bf16.msra.mxu0 %v1318
      %1338 = vmatprep.subr.bf16.mxu0 0
      %1339 = vmatpush1.bf16.msra.mxu0 %v1317
      %1340 = vmatprep.subr.bf16.mxu0 0
      %1341 = vmatpush1.bf16.msra.mxu0 %v1316
      %1342 = vmatprep.subr.bf16.mxu0 0
      %1343 = vmatpush1.bf16.msra.mxu0 %v1315
      %1344 = vmatprep.subr.bf16.mxu0 0
      %1345 = vmatpush1.bf16.msra.mxu0 %v1314
      %1346 = vmatprep.subr.bf16.mxu0 0
      %1347 = vmatpush2.bf16.msra.mxu0 0
      %1348 = vmatprep.subr.bf16.mxu0 0
      %1349 = vmatpush2.bf16.msra.mxu0 0
      %1350 = vmatprep.subr.bf16.mxu0 0
      %1351 = vmatpush2.bf16.msra.mxu0 0
      %1352 = vmatprep.subr.bf16.mxu0 0
      %1353 = vmatpush2.bf16.msra.mxu0 0
      %1354 = vmatprep.subr.bf16.mxu0 0
      %1355 = vmatpush2.bf16.msra.mxu0 0
      %1356 = vmatprep.subr.bf16.mxu0 0
      %1357 = vmatpush2.bf16.msra.mxu0 0
      %1358 = vmatprep.subr.bf16.mxu0 0
      %1359 = vmatpush2.bf16.msra.mxu0 0
      %1360 = vmatprep.subr.bf16.mxu0 0
      %1361 = vmatpush2.bf16.msra.mxu0 0
      %1362 = vmatprep.mubr.bf16.mxu0 0
      %1363 = vmatmul.mubr.bf16.gmra.mxu0 %v1255
      %v1364 = vpop.f32.mrf.mxu0
      %v1365 = vadd.f32 %v1280, %v1364
      %v1366 = vpop.f32.mrf.mxu0
      %v1367 = vpop.f32.mrf.mxu0
      %v1368 = vadd.f32 %v1280, %v1367
      %v1369 = vpop.f32.mrf.mxu0
      %1370 = vmatprep.mubr.bf16.mxu0 0
      %1371 = vmatmul.mubr.bf16.gmra.mxu0 %v1256
      %v1372 = vpop.f32.mrf.mxu0
      %v1373 = vadd.f32 %v1280, %v1372
      %v1374 = vpop.f32.mrf.mxu0
      %v1375 = vpop.f32.mrf.mxu0
      %v1376 = vadd.f32 %v1280, %v1375
      %v1377 = vpop.f32.mrf.mxu0
      %1378 = vdwg.mxu0
      %v1379 = vmul.f32 %v1365, 0.2
      %v1380 = vmul.f32 %v1368, 0.2
      %v1381 = vmul.f32 %v1373, 0.2
      %v1382 = vmul.f32 %v1376, 0.2
      %v1383 = vmax.f32 %v1365, %v1379
      %v1384 = vmax.f32 %v1368, %v1380
      %v1385 = vmax.f32 %v1373, %v1381
      %v1386 = vmax.f32 %v1376, %v1382
      %1387 = vst [vmem:[%s199] sm:$0xff] %v1383
      %1388 = vst [vmem:[%s199 + $0x8] sm:$0xff] %v1384
      %1389 = vst [vmem:[%s199 + $0x10] sm:$0xff] %v1385
      %1390 = vst [vmem:[%s199 + $0x18] sm:$0xff] %v1386
      %s1391 = smul.u32 4, %s15
      %p1392 = scmp.lt.s32.totalorder %s1391, 7
      %s1393 = scalar_select %p1392, %s1391, 7
      %s1394 = smul.addr %s1393, 8
      %s1395 = scalar_lea.vmem %s4, %s1394
      // Predicated region
      $region37: #{mapping_network.1} parent=35 // pred_check
        %p1396 = pneg %p122
      $region38: #{mapping_network.1} parent=35 // pred_check_branch
        %1398 = sbr.rel (%p1396) target = $region40
      $region39: #{mapping_network.1} parent=35 // pred_region
        %s1399 = smul.u32 4, %s15
      $region40: #{mapping_network.1} parent=35 // pred_fallthru
        _
    $region36: #{mapping_network.1} parent=5 // pred_fallthru
      _
    %p1400 = scmp.le.s32.totalorder 2, %s10
    // Predicated region
    $region41: #{mapping_network.1} parent=5 // pred_check
      %p1401 = pneg %p1400
    $region42: #{mapping_network.1} parent=5 // pred_check_branch
      %1403 = sbr.rel (%p1401) target = $region44
    $region43: #{mapping_network.1} parent=5 // pred_region
      %s1404 = ssub.s32 %s10, 2
      // Predicated region
      $region45: #{mapping_network.1} parent=43 // pred_check
        %p1405 = pneg %p128
      $region46: #{mapping_network.1} parent=43 // pred_check_branch
        %1407 = sbr.rel (%p1405) target = $region48
      $region47: #{mapping_network.1} parent=43 // pred_region
        %s1408 = smul.u32 4, %s16
        %p1409 = scmp.lt.s32.totalorder %s1408, 7
        %s1410 = scalar_select %p1409, %s1408, 7
        %s1411 = smul.addr %s1410, 8
        %s1412 = scalar_lea.vmem %s4, %s1411
      $region48: #{mapping_network.1} parent=43 // pred_fallthru
        _
    $region44: #{mapping_network.1} parent=5 // pred_fallthru
      _
  $region6: #{mapping_network.1} parent=0 // loop_footer
    %s14 = sadd.s32 1, %s10
  $region7: #{mapping_network.1} parent=0 // loop_footer_branch
    %9 = sbr.rel target = $region3
  $region8: #{mapping_network.1} parent=0 // loop_exit
    _

</llo_original>
